<compile_context>
chip_gen: v7x
topology: tpu7x:2x2x1
jax: 0.10.0
libtpu: 0.0.40
codegen_flags: <defaults>
</compile_context>

<pallas_src>
import functools

import jax
import jax.numpy as jnp
from jax import lax
from jax.experimental import pallas as pl
from jax.experimental.pallas import tpu as pltpu


# ~2 MiB x tile -> ~8 MiB total for double-buffered in+out tiles; fits the
# scoped-VMEM default on v5e (16 MiB), v6e (32 MiB) and v7x (32 MiB).
_TARGET_TILE_BYTES = 2 << 20
_MAX_BLOCK_ROWS = 4096


def _round_down8(n):
    return max(8, (n // 8) * 8)


def _round_up8(n):
    return ((n + 7) // 8) * 8


def _layernorm_kernel(x_ref, gamma_ref, beta_ref, out_ref, *, eps):
    # In-kernel upcast: input DMA stays in the native dtype (halves HBM bytes
    # for bf16), compute is f32, output is written back in the native dtype.
    x = x_ref[...].astype(jnp.float32)                  # [TB, D]
    g = gamma_ref[...].astype(jnp.float32)              # [1,  D]
    b = beta_ref[...].astype(jnp.float32)               # [1,  D]

    u = jnp.mean(x, axis=-1, keepdims=True)             # [TB, 1] (XLU reduce)
    xc = x - u
    s = jnp.mean(xc * xc, axis=-1, keepdims=True)       # biased variance
    inv = lax.rsqrt(s + eps)                            # EUP rsqrt (free slot)
    out_ref[...] = (xc * inv * g + b).astype(out_ref.dtype)


def layer_norm(x, gamma, beta, *, eps=1e-12, block_rows=None):
    """LayerNorm over the last axis of x. gamma/beta: [size]. eps matches the
    module default (1e-12, BERT-style)."""
    orig_shape = x.shape
    D = orig_shape[-1]

    x2 = x.reshape(-1, D)                               # native dtype, no copy
    R = x2.shape[0]
    itemsize = jnp.dtype(x2.dtype).itemsize

    # --- Row tile selection -------------------------------------------------
    if block_rows is not None:
        tb = _round_down8(block_rows)                   # defensive 8-alignment
    else:
        tb = _round_down8(_TARGET_TILE_BYTES // (D * itemsize))
        tb = min(tb, _MAX_BLOCK_ROWS)
    # Keep at least 2 grid steps when there are enough rows so the "parallel"
    # row axis shards across both TensorCores on v7x.
    if R >= 16:
        tb = min(tb, _round_up8(pl.cdiv(R, 2)))
    if tb >= R:
        tb = R                                          # single full block
    grid = (pl.cdiv(R, tb),)

    gamma2 = gamma.reshape(1, D)
    beta2 = beta.reshape(1, D)

    # Honest scheduling hints (native element sizes, no padded rows).
    param_bytes = D * (jnp.dtype(gamma2.dtype).itemsize
                       + jnp.dtype(beta2.dtype).itemsize)
    bytes_accessed = R * D * itemsize * 2 + param_bytes
    flops = 7 * R * D
    transcendentals = R

    out = pl.pallas_call(
        functools.partial(_layernorm_kernel, eps=eps),
        out_shape=jax.ShapeDtypeStruct((R, D), x2.dtype),
        grid=grid,
        in_specs=[
            pl.BlockSpec((tb, D), lambda i: (i, 0)),    # x row tile (streamed)
            pl.BlockSpec((1, D), lambda i: (0, 0)),     # gamma (VMEM-resident)
            pl.BlockSpec((1, D), lambda i: (0, 0)),     # beta  (VMEM-resident)
        ],
        out_specs=pl.BlockSpec((tb, D), lambda i: (i, 0)),
        compiler_params=pltpu.CompilerParams(
            dimension_semantics=("parallel",),
            # Default tiles use ~8-10 MiB; raise the scoped limit a bit in
            # case a caller passes a large block_rows (safe on all chips:
            # v5e/v6e have 128 MiB physical VMEM, v7x has 64 MiB).
            vmem_limit_bytes=32 << 20,
        ),
        cost_estimate=pl.CostEstimate(
            flops=flops,
            transcendentals=transcendentals,
            bytes_accessed=bytes_accessed),
    )(x2, gamma2, beta2)

    return out.reshape(orig_shape)


if __name__ == "__main__":
    eps = 1e-12
    hidden = 128

    def reference(x, gamma, beta):
        xf = x.astype(jnp.float32)
        u = jnp.mean(xf, axis=-1, keepdims=True)
        s = jnp.mean((xf - u) ** 2, axis=-1, keepdims=True)
        return (gamma.astype(jnp.float32) * (xf - u) / jnp.sqrt(s + eps)
                + beta.astype(jnp.float32))

    key = jax.random.PRNGKey(0)
    k1, k2, k3, k4 = jax.random.split(key, 4)
    gamma = 1.0 + 0.1 * jax.random.normal(k2, (hidden,), dtype=jnp.float32)
    beta = 0.1 * jax.random.normal(k3, (hidden,), dtype=jnp.float32)

    # Case 1: f32, 144 rows -> two 72-row blocks (multi-step parallel grid).
    x = jax.random.normal(k1, (2, 72, hidden), dtype=jnp.float32)
    y = layer_norm(x, gamma, beta, eps=eps)
    jax.block_until_ready(y)
    ref = reference(x, gamma, beta)
    assert y.shape == x.shape and y.dtype == x.dtype
    assert jnp.allclose(y, ref, atol=1e-5), float(jnp.max(jnp.abs(y - ref)))

    # Case 2: ragged last row-block (75 rows -> 2 blocks of 40; no jnp.pad).
    x_r = jax.random.normal(k4, (3, 25, hidden), dtype=jnp.float32)
    y_r = layer_norm(x_r, gamma, beta, eps=eps)
    jax.block_until_ready(y_r)
    ref_r = reference(x_r, gamma, beta)
    assert jnp.allclose(y_r, ref_r, atol=1e-5), float(jnp.max(jnp.abs(y_r - ref_r)))

    # Case 3: bf16 input/output -- dtype conversion happens inside the kernel.
    xb = x.astype(jnp.bfloat16)
    gb = gamma.astype(jnp.bfloat16)
    bb = beta.astype(jnp.bfloat16)
    yb = layer_norm(xb, gb, bb, eps=eps)
    jax.block_until_ready(yb)
    refb = reference(xb, gb, bb)
    assert yb.dtype == jnp.bfloat16
    assert jnp.allclose(yb.astype(jnp.float32), refb, atol=5e-2)

    print("KERNEL_OK")
</pallas_src>

<mosaic_0001>
module attributes {stable_mosaic.version = 11 : i64} {
  func.func @_layernorm_kernel(%arg0: i32, %arg1: memref<72x128xf32, #tpu.memory_space<vmem>>, %arg2: memref<1x128xf32, #tpu.memory_space<vmem>>, %arg3: memref<1x128xf32, #tpu.memory_space<vmem>>, %arg4: memref<72x128xf32, #tpu.memory_space<vmem>>) attributes {dimension_semantics = [#tpu.dimension_semantics<parallel>], iteration_bounds = array<i64: 2>, scalar_prefetch = 0 : i64, scratch_operands = 0 : i64, tpu.core_type = #tpu.core_type<tc>, window_params = [{transform_indices = @transform_0, window_bounds = array<i64: 72, 128>}, {pipeline_mode = #tpu.pipeline_mode<synchronous>, transform_indices = @transform_1, window_bounds = array<i64: 1, 128>}, {pipeline_mode = #tpu.pipeline_mode<synchronous>, transform_indices = @transform_2, window_bounds = array<i64: 1, 128>}, {transform_indices = @transform_3, window_bounds = array<i64: 72, 128>}]} {
    %c0 = arith.constant 0 : index
    %c0_0 = arith.constant 0 : index
    %0 = vector.load %arg1[%c0, %c0_0] : memref<72x128xf32, #tpu.memory_space<vmem>>, vector<72x128xf32>
    %c0_1 = arith.constant 0 : index
    %c0_2 = arith.constant 0 : index
    %1 = vector.load %arg2[%c0_1, %c0_2] : memref<1x128xf32, #tpu.memory_space<vmem>>, vector<1x128xf32>
    %c0_3 = arith.constant 0 : index
    %c0_4 = arith.constant 0 : index
    %2 = vector.load %arg3[%c0_3, %c0_4] : memref<1x128xf32, #tpu.memory_space<vmem>>, vector<1x128xf32>
    %cst = arith.constant dense<0.000000e+00> : vector<72xf32>
    %3 = vector.multi_reduction <add>, %0, %cst [1] : vector<72x128xf32> to vector<72xf32>
    %4 = vector.shape_cast %3 : vector<72xf32> to vector<72x1xf32>
    %cst_5 = arith.constant 1.280000e+02 : f32
    %5 = vector.broadcast %cst_5 : f32 to vector<72x1xf32>
    %6 = arith.divf %4, %5 : vector<72x1xf32>
    %7 = vector.broadcast %6 : vector<72x1xf32> to vector<72x128xf32>
    %8 = arith.subf %0, %7 : vector<72x128xf32>
    %9 = arith.mulf %8, %8 : vector<72x128xf32>
    %cst_6 = arith.constant dense<0.000000e+00> : vector<72xf32>
    %10 = vector.multi_reduction <add>, %9, %cst_6 [1] : vector<72x128xf32> to vector<72xf32>
    %11 = vector.shape_cast %10 : vector<72xf32> to vector<72x1xf32>
    %cst_7 = arith.constant 1.280000e+02 : f32
    %12 = vector.broadcast %cst_7 : f32 to vector<72x1xf32>
    %13 = arith.divf %11, %12 : vector<72x1xf32>
    %cst_8 = arith.constant 9.99999996E-13 : f32
    %14 = vector.broadcast %cst_8 : f32 to vector<72x1xf32>
    %15 = arith.addf %13, %14 : vector<72x1xf32>
    %16 = math.rsqrt %15 : vector<72x1xf32>
    %17 = vector.broadcast %16 : vector<72x1xf32> to vector<72x128xf32>
    %18 = arith.mulf %8, %17 : vector<72x128xf32>
    %19 = vector.broadcast %1 : vector<1x128xf32> to vector<72x128xf32>
    %20 = arith.mulf %18, %19 : vector<72x128xf32>
    %21 = vector.broadcast %2 : vector<1x128xf32> to vector<72x128xf32>
    %22 = arith.addf %20, %21 : vector<72x128xf32>
    %c0_9 = arith.constant 0 : index
    %c0_10 = arith.constant 0 : index
    %23 = vector.load %arg4[%c0_9, %c0_10] : memref<72x128xf32, #tpu.memory_space<vmem>>, vector<72x128xf32>
    tpu.vector_store %arg4[%c0_9, %c0_10], %22 {strides = array<i32>} : memref<72x128xf32, #tpu.memory_space<vmem>>, vector<72x128xf32>,
    return
  }
  func.func @transform_0(%arg0: i32) -> (i32, i32) {
    %c0_i32 = arith.constant 0 : i32
    %c0_i32_0 = arith.constant 0 : i32
    return %arg0, %c0_i32 : i32, i32
  }
  func.func @transform_1(%arg0: i32) -> (i32, i32) {
    %c0_i32 = arith.constant 0 : i32
    %c0_i32_0 = arith.constant 0 : i32
    %c0_i32_1 = arith.constant 0 : i32
    return %c0_i32, %c0_i32_0 : i32, i32
  }
  func.func @transform_2(%arg0: i32) -> (i32, i32) {
    %c0_i32 = arith.constant 0 : i32
    %c0_i32_0 = arith.constant 0 : i32
    %c0_i32_1 = arith.constant 0 : i32
    return %c0_i32, %c0_i32_0 : i32, i32
  }
  func.func @transform_3(%arg0: i32) -> (i32, i32) {
    %c0_i32 = arith.constant 0 : i32
    %c0_i32_0 = arith.constant 0 : i32
    return %arg0, %c0_i32 : i32, i32
  }
}

</mosaic_0001>

<llo_original>
// kernel: tpu_custom_call.1
$region0: #{tpu_custom_call.1}
  #allocation0 [shape = 'u32[]', space=smem, size = 0x4, offset = 0x4, fixed_abs, tag = 'smem constant byte address 0x4 - core index']
  #allocation1 [shape = 'u32[144,128]{1,0:T(1,128)}', space=vmem, size = 0x12000, scoped, tag = 'internal scratch']
  %s0 = inlined_call_operand.hbm [shape: f32[144,128], index: 0, kind: input, shape index: {}]
  %s1 = inlined_call_operand.vmem [shape: f32[1,128], index: 1, kind: input, shape index: {}]
  %s2 = inlined_call_operand.vmem [shape: f32[1,128], index: 2, kind: input, shape index: {}]
  %s3 = inlined_call_operand.hbm [shape: f32[144,128], index: 3, kind: output, shape index: {}]
  %s4 = sld [smem:[#allocation0]]
  $region49: #{tpu_custom_call.1} parent=0
    _
  %s6 = ssub.s32 1, %s4
  %s7 = scalar_select 0, %s6, %s4
  $region1: #{tpu_custom_call.1} parent=0
    #allocation2 [shape = 'u8[73728]{0}', space=vmem, size = 0x12000, scoped, tag = 'input window, operand 0']
    #allocation3 [shape = 's32[2]{0}', space=sflag, size = 0x8, scoped, tag = 'scoped memory for tpu_custom_call.1']
    #allocation4 [shape = 's32[2]{0}', space=sflag, size = 0x8, scoped, tag = 'scoped memory for tpu_custom_call.1']
    #allocation5 [shape = 'u8[73728]{0}', space=vmem, size = 0x12000, scoped, tag = 'output window, operand 0']
    %8 = vsyncpa [#allocation3], 0
    %s9 = scalar_lea.sflag [#allocation3], 1
    %10 = vsyncpa %s9, 0
    %11 = vsyncpa [#allocation4], 0
    %s12 = scalar_lea.sflag [#allocation4], 1
    %13 = vsyncpa %s12, 0
    loop: start=0, step=1, limit=4
    $region2: #{tpu_custom_call.1} parent=1 // loop_pre_header
      _
    $region3: #{tpu_custom_call.1} parent=1 // loop_header
      %s15 = sphi 0, %s19
      %p16 = scmp.ge.s32.totalorder %s15, 4
      %s25 = sphi 0, %s27
      %s28 = sphi 0, %s25
      %s29 = sphi 0, %s28
      %s45 = sphi 0, %s29
      %s49 = sphi 0, %s49
      %s51 = sphi 0, %s49
      %s52 = sphi 0, %s51
      %s66 = sphi 0, %s52
      %s70 = sphi 0, %s70
      %s72 = sphi 0, %s70
      %s73 = sphi 0, %s72
      %s87 = sphi 0, %s73
      %s93 = sphi 0, %s95
      %s96 = sphi 0, %s93
      %s97 = sphi 0, %s96
      %s113 = sphi 0, %s97
    $region4: #{tpu_custom_call.1} parent=1 // loop_header_branch
      %18 = sbr.rel (%p16) target = $region8
    $region5: #{tpu_custom_call.1} parent=1 // loop_body
      %s20 = ssub.s32 %s15, 1
      %s21 = ssub.s32 %s15, 2
      %s22 = sadd.s32 %s15, 1
      %s23 = ssub.s32 %s15, %s22
      %p24 = scmp.eq.s32.totalorder %s23, 0
      %s26 = sadd.s32 %s25, 1
      %s27 = scalar_select %p24, %s25, %s26
      %p30 = pneg %p24
      %p31 = scmp.eq.s32.totalorder %s15, 1
      %p32 = por %p30, %p31
      %p33 = scmp.ne.s32.totalorder %s25, %s28
      %p34 = scmp.eq.s32.totalorder %s15, 0
      %p35 = por %p33, %p34
      %p36 = scmp.ne.s32.totalorder %s25, %s28
      %p37 = scmp.eq.s32.totalorder %s20, 1
      %p38 = por %p36, %p37
      %p39 = scmp.ne.s32.totalorder %s28, %s29
      %p40 = scmp.eq.s32.totalorder %s20, 0
      %p41 = por %p39, %p40
      %p42 = scmp.ne.s32.totalorder %s28, %s29
      %p43 = scmp.eq.s32.totalorder %s21, 1
      %p44 = por %p42, %p43
      %p46 = scmp.ne.s32.totalorder %s29, %s45
      %p47 = scmp.eq.s32.totalorder %s21, 0
      %p48 = por %p46, %p47
      %s50 = sadd.s32 %s49, 1
      %p53 = scmp.eq.s32.totalorder %s15, 1
      %p54 = scmp.ne.s32.totalorder %s49, %s51
      %p55 = scmp.eq.s32.totalorder %s15, 0
      %p56 = por %p54, %p55
      %p57 = scmp.ne.s32.totalorder %s49, %s51
      %p58 = scmp.eq.s32.totalorder %s20, 1
      %p59 = por %p57, %p58
      %p60 = scmp.ne.s32.totalorder %s51, %s52
      %p61 = scmp.eq.s32.totalorder %s20, 0
      %p62 = por %p60, %p61
      %p63 = scmp.ne.s32.totalorder %s51, %s52
      %p64 = scmp.eq.s32.totalorder %s21, 1
      %p65 = por %p63, %p64
      %p67 = scmp.ne.s32.totalorder %s52, %s66
      %p68 = scmp.eq.s32.totalorder %s21, 0
      %p69 = por %p67, %p68
      %s71 = sadd.s32 %s70, 1
      %p74 = scmp.eq.s32.totalorder %s15, 1
      %p75 = scmp.ne.s32.totalorder %s70, %s72
      %p76 = scmp.eq.s32.totalorder %s15, 0
      %p77 = por %p75, %p76
      %p78 = scmp.ne.s32.totalorder %s70, %s72
      %p79 = scmp.eq.s32.totalorder %s20, 1
      %p80 = por %p78, %p79
      %p81 = scmp.ne.s32.totalorder %s72, %s73
      %p82 = scmp.eq.s32.totalorder %s20, 0
      %p83 = por %p81, %p82
      %p84 = scmp.ne.s32.totalorder %s72, %s73
      %p85 = scmp.eq.s32.totalorder %s21, 1
      %p86 = por %p84, %p85
      %p88 = scmp.ne.s32.totalorder %s73, %s87
      %p89 = scmp.eq.s32.totalorder %s21, 0
      %p90 = por %p88, %p89
      %s91 = ssub.s32 %s15, %s22
      %p92 = scmp.eq.s32.totalorder %s91, 0
      %s94 = sadd.s32 %s93, 1
      %s95 = scalar_select %p92, %s93, %s94
      %p98 = pneg %p92
      %p99 = scmp.eq.s32.totalorder %s15, 1
      %p100 = por %p98, %p99
      %p101 = scmp.ne.s32.totalorder %s93, %s96
      %p102 = scmp.eq.s32.totalorder %s15, 0
      %p103 = por %p101, %p102
      %p104 = scmp.ne.s32.totalorder %s93, %s96
      %p105 = scmp.eq.s32.totalorder %s20, 1
      %p106 = por %p104, %p105
      %p107 = scmp.ne.s32.totalorder %s96, %s97
      %p108 = scmp.eq.s32.totalorder %s20, 0
      %p109 = por %p107, %p108
      %p110 = scmp.ne.s32.totalorder %s96, %s97
      %p111 = scmp.eq.s32.totalorder %s21, 1
      %p112 = por %p110, %p111
      %p114 = scmp.ne.s32.totalorder %s97, %s113
      %p115 = scmp.eq.s32.totalorder %s21, 0
      %p116 = por %p114, %p115
      %p117 = scmp.le.s32.totalorder 1, %s15
      %p118 = scmp.lt.s32.totalorder %s15, 3
      %p119 = pnand %p117, %p118
      %p120 = pneg %p119
      // Predicated region
      $region9: #{tpu_custom_call.1} parent=5 // pred_check
        _
      $region10: #{tpu_custom_call.1} parent=5 // pred_check_branch
        %122 = sbr.rel (%p119) target = $region12
      $region11: #{tpu_custom_call.1} parent=5 // pred_region
        %s123 = ssub.s32 %s15, 1
        // Predicated region
        $region13: #{tpu_custom_call.1} parent=11 // pred_check
          %p124 = pneg %p62
        $region14: #{tpu_custom_call.1} parent=11 // pred_check_branch
          %126 = sbr.rel (%p124) target = $region16
        $region15: #{tpu_custom_call.1} parent=11 // pred_region
          _
        $region16: #{tpu_custom_call.1} parent=11 // pred_fallthru
          _
        // Predicated region
        $region17: #{tpu_custom_call.1} parent=11 // pred_check
          %p127 = pneg %p83
        $region18: #{tpu_custom_call.1} parent=11 // pred_check_branch
          %129 = sbr.rel (%p127) target = $region20
        $region19: #{tpu_custom_call.1} parent=11 // pred_region
          _
        $region20: #{tpu_custom_call.1} parent=11 // pred_fallthru
          _
      $region12: #{tpu_custom_call.1} parent=5 // pred_fallthru
        _
      %p130 = scmp.lt.s32.totalorder %s15, 2
      // Predicated region
      $region21: #{tpu_custom_call.1} parent=5 // pred_check
        %p131 = pneg %p130
      $region22: #{tpu_custom_call.1} parent=5 // pred_check_branch
        %133 = sbr.rel (%p131) target = $region24
      $region23: #{tpu_custom_call.1} parent=5 // pred_region
        // Predicated region
        $region25: #{tpu_custom_call.1} parent=23 // pred_check
          %p134 = pneg %p35
        $region26: #{tpu_custom_call.1} parent=23 // pred_check_branch
          %136 = sbr.rel (%p134) target = $region28
        $region27: #{tpu_custom_call.1} parent=23 // pred_region
          %s137 = sand.u32 %s25, 1
          %s138 = scalar_lea.sflag [#allocation3], %s137
          %s139 = sand.u32 %s25, 1
          %s140 = smul.addr %s139, 72
          %s141 = scalar_lea.vmem [#allocation2], %s140
          %s142 = smul.u32 9, %s15
          %s144 = ssub.s32 1152, 1152
          %145 = vsyncadd %s138, %s144
          %s146 = smul.addr %s142, 128
          %s147 = scalar_lea.hbm %s0, %s146
          %s148 = sshll.u32 %s141, 4
          %s149 = int_to_ptr.vmem [resolvable:$true] %s148
          %154 = dma.hbm_to_vmem [thread:$0]  %s147, 1152, %s149, %s138, 128, 128, 8
        $region28: #{tpu_custom_call.1} parent=23 // pred_fallthru
          _
      $region24: #{tpu_custom_call.1} parent=5 // pred_fallthru
        _
      %p155 = scmp.le.s32.totalorder 1, %s15
      %p156 = scmp.lt.s32.totalorder %s15, 3
      %p157 = pnand %p155, %p156
      %p158 = pneg %p157
      // Predicated region
      $region29: #{tpu_custom_call.1} parent=5 // pred_check
        _
      $region30: #{tpu_custom_call.1} parent=5 // pred_check_branch
        %160 = sbr.rel (%p157) target = $region32
      $region31: #{tpu_custom_call.1} parent=5 // pred_region
        %s161 = ssub.s32 %s15, 1
        %s162 = sand.u32 %s28, 1
        %s163 = scalar_lea.sflag [#allocation3], %s162
        %s164 = sand.u32 %s28, 1
        %s165 = smul.addr %s164, 72
        %s166 = scalar_lea.vmem [#allocation2], %s165
        // Predicated region
        $region33: #{tpu_custom_call.1} parent=31 // pred_check
          %p167 = pneg %p41
        $region34: #{tpu_custom_call.1} parent=31 // pred_check_branch
          %169 = sbr.rel (%p167) target = $region36
        $region35: #{tpu_custom_call.1} parent=31 // pred_region
          %170 = dma.done %s163, 1152
        $region36: #{tpu_custom_call.1} parent=31 // pred_fallthru
          _
        %s171 = sand.u32 %s28, 1
        %s172 = scalar_lea.sflag [#allocation3], %s171
        %s173 = sand.u32 %s28, 1
        %s174 = smul.addr %s173, 72
        %s175 = scalar_lea.vmem [#allocation2], %s174
        %p176 = pneg %p41
        %p177 = pneg %p38
        %p178 = pneg %p62
        %p179 = pneg %p59
        %p180 = pneg %p83
        %p181 = pneg %p80
        %p182 = pneg %p109
        %p183 = pneg %p106
        %s184 = sand.u32 %s96, 1
        %s185 = scalar_lea.sflag [#allocation4], %s184
        %s186 = sand.u32 %s96, 1
        %s187 = smul.addr %s186, 72
        %s188 = scalar_lea.vmem [#allocation5], %s187
        %s189 = smul.u32 9, %s20
        %s190 = smul.u32 9, %s20
        %v191 = vld [vmem:[%s166] sm:$0xff]
        %v192 = vld [vmem:[%s166 + $0x8] sm:$0xff]
        %v193 = vld [vmem:[%s166 + $0x10] sm:$0xff]
        %v194 = vld [vmem:[%s166 + $0x18] sm:$0xff]
        %v195 = vld [vmem:[%s166 + $0x20] sm:$0xff]
        %v196 = vld [vmem:[%s166 + $0x28] sm:$0xff]
        %v197 = vld [vmem:[%s166 + $0x30] sm:$0xff]
        %v198 = vld [vmem:[%s166 + $0x38] sm:$0xff]
        %v199 = vld [vmem:[%s166 + $0x40] sm:$0xff]
        %v200 = vld [vmem:[%s1] sm:$0x1]
        %v201 = vld [vmem:[%s2] sm:$0x1]
        %202 = vadd.xlane.f32.xlu0 %v191
        %v203 = vpop.xlane.xlu0 %202
        %204 = vadd.xlane.f32.xlu0 %v192
        %v205 = vpop.xlane.xlu0 %204
        %206 = vadd.xlane.f32.xlu0 %v193
        %v207 = vpop.xlane.xlu0 %206
        %208 = vadd.xlane.f32.xlu0 %v194
        %v209 = vpop.xlane.xlu0 %208
        %210 = vadd.xlane.f32.xlu0 %v195
        %v211 = vpop.xlane.xlu0 %210
        %212 = vadd.xlane.f32.xlu0 %v196
        %v213 = vpop.xlane.xlu0 %212
        %214 = vadd.xlane.f32.xlu0 %v197
        %v215 = vpop.xlane.xlu0 %214
        %216 = vadd.xlane.f32.xlu0 %v198
        %v217 = vpop.xlane.xlu0 %216
        %218 = vadd.xlane.f32.xlu0 %v199
        %v219 = vpop.xlane.xlu0 %218
        %v220 = vrcp.pop 128.0
        %v221 = vmul.f32 %v203, %v220
        %v222 = vmul.f32 %v205, %v220
        %v223 = vmul.f32 %v207, %v220
        %v224 = vmul.f32 %v209, %v220
        %v225 = vmul.f32 %v211, %v220
        %v226 = vmul.f32 %v213, %v220
        %v227 = vmul.f32 %v215, %v220
        %v228 = vmul.f32 %v217, %v220
        %v229 = vmul.f32 %v219, %v220
        %v230 = vsub.f32 %v191, %v221
        %v231 = vsub.f32 %v192, %v222
        %v232 = vsub.f32 %v193, %v223
        %v233 = vsub.f32 %v194, %v224
        %v234 = vsub.f32 %v195, %v225
        %v235 = vsub.f32 %v196, %v226
        %v236 = vsub.f32 %v197, %v227
        %v237 = vsub.f32 %v198, %v228
        %v238 = vsub.f32 %v199, %v229
        %v239 = vmul.f32 %v230, %v230
        %v240 = vmul.f32 %v231, %v231
        %v241 = vmul.f32 %v232, %v232
        %v242 = vmul.f32 %v233, %v233
        %v243 = vmul.f32 %v234, %v234
        %v244 = vmul.f32 %v235, %v235
        %v245 = vmul.f32 %v236, %v236
        %v246 = vmul.f32 %v237, %v237
        %v247 = vmul.f32 %v238, %v238
        %248 = vadd.xlane.f32.xlu0 %v239
        %v249 = vpop.xlane.xlu0 %248
        %250 = vadd.xlane.f32.xlu0 %v240
        %v251 = vpop.xlane.xlu0 %250
        %252 = vadd.xlane.f32.xlu0 %v241
        %v253 = vpop.xlane.xlu0 %252
        %254 = vadd.xlane.f32.xlu0 %v242
        %v255 = vpop.xlane.xlu0 %254
        %256 = vadd.xlane.f32.xlu0 %v243
        %v257 = vpop.xlane.xlu0 %256
        %258 = vadd.xlane.f32.xlu0 %v244
        %v259 = vpop.xlane.xlu0 %258
        %260 = vadd.xlane.f32.xlu0 %v245
        %v261 = vpop.xlane.xlu0 %260
        %262 = vadd.xlane.f32.xlu0 %v246
        %v263 = vpop.xlane.xlu0 %262
        %264 = vadd.xlane.f32.xlu0 %v247
        %v265 = vpop.xlane.xlu0 %264
        %v266 = vmul.f32 %v249, %v220
        %v267 = vmul.f32 %v251, %v220
        %v268 = vmul.f32 %v253, %v220
        %v269 = vmul.f32 %v255, %v220
        %v270 = vmul.f32 %v257, %v220
        %v271 = vmul.f32 %v259, %v220
        %v272 = vmul.f32 %v261, %v220
        %v273 = vmul.f32 %v263, %v220
        %v274 = vmul.f32 %v265, %v220
        %v275 = vadd.f32 %v266, 1e-12
        %v276 = vadd.f32 %v267, 1e-12
        %v277 = vadd.f32 %v268, 1e-12
        %v278 = vadd.f32 %v269, 1e-12
        %v279 = vadd.f32 %v270, 1e-12
        %v280 = vadd.f32 %v271, 1e-12
        %v281 = vadd.f32 %v272, 1e-12
        %v282 = vadd.f32 %v273, 1e-12
        %v283 = vadd.f32 %v274, 1e-12
        %v284 = vrsqrt.pop %v275
        %v285 = vrsqrt.pop %v276
        %v286 = vrsqrt.pop %v277
        %v287 = vrsqrt.pop %v278
        %v288 = vrsqrt.pop %v279
        %v289 = vrsqrt.pop %v280
        %v290 = vrsqrt.pop %v281
        %v291 = vrsqrt.pop %v282
        %v292 = vrsqrt.pop %v283
        %v293 = vmul.f32 %v230, %v284
        %v294 = vmul.f32 %v231, %v285
        %v295 = vmul.f32 %v232, %v286
        %v296 = vmul.f32 %v233, %v287
        %v297 = vmul.f32 %v234, %v288
        %v298 = vmul.f32 %v235, %v289
        %v299 = vmul.f32 %v236, %v290
        %v300 = vmul.f32 %v237, %v291
        %v301 = vmul.f32 %v238, %v292
        %v303 = vlaneseq
        %v304 = vshrl.u32 %v303, 7
        %v305 = vsub.s32 0, %v304
        %v306 = vrot.slane %v200, %v305
        %v308 = vmul.f32 %v293, %v306
        %v309 = vmul.f32 %v294, %v306
        %v310 = vmul.f32 %v295, %v306
        %v311 = vmul.f32 %v296, %v306
        %v312 = vmul.f32 %v297, %v306
        %v313 = vmul.f32 %v298, %v306
        %v314 = vmul.f32 %v299, %v306
        %v315 = vmul.f32 %v300, %v306
        %v316 = vmul.f32 %v301, %v306
        %v318 = vlaneseq
        %v319 = vshrl.u32 %v318, 7
        %v320 = vsub.s32 0, %v319
        %v321 = vrot.slane %v201, %v320
        %v323 = vadd.f32 %v308, %v321
        %v324 = vadd.f32 %v309, %v321
        %v325 = vadd.f32 %v310, %v321
        %v326 = vadd.f32 %v311, %v321
        %v327 = vadd.f32 %v312, %v321
        %v328 = vadd.f32 %v313, %v321
        %v329 = vadd.f32 %v314, %v321
        %v330 = vadd.f32 %v315, %v321
        %v331 = vadd.f32 %v316, %v321
        %332 = vst [vmem:[%s188] sm:$0xff] %v323
        %333 = vst [vmem:[%s188 + $0x8] sm:$0xff] %v324
        %334 = vst [vmem:[%s188 + $0x10] sm:$0xff] %v325
        %335 = vst [vmem:[%s188 + $0x18] sm:$0xff] %v326
        %336 = vst [vmem:[%s188 + $0x20] sm:$0xff] %v327
        %337 = vst [vmem:[%s188 + $0x28] sm:$0xff] %v328
        %338 = vst [vmem:[%s188 + $0x30] sm:$0xff] %v329
        %339 = vst [vmem:[%s188 + $0x38] sm:$0xff] %v330
        %340 = vst [vmem:[%s188 + $0x40] sm:$0xff] %v331
        %s341 = sand.u32 %s96, 1
        %s342 = scalar_lea.sflag [#allocation4], %s341
        %s343 = sand.u32 %s96, 1
        %s344 = smul.addr %s343, 72
        %s345 = scalar_lea.vmem [#allocation5], %s344
        // Predicated region
        $region37: #{tpu_custom_call.1} parent=31 // pred_check
          %p346 = pneg %p106
        $region38: #{tpu_custom_call.1} parent=31 // pred_check_branch
          %348 = sbr.rel (%p346) target = $region40
        $region39: #{tpu_custom_call.1} parent=31 // pred_region
          %s349 = smul.u32 9, %s20
          %s351 = ssub.s32 1152, 1152
          %352 = vsyncadd %s342, %s351
          %s353 = smul.addr %s349, 128
          %s354 = scalar_lea.hbm %s3, %s353
          %s355 = sshll.u32 %s345, 4
          %s356 = int_to_ptr.vmem [resolvable:$true] %s355
          %361 = dma.vmem_to_hbm [thread:$0]  %s356, 1152, %s354, %s342, 128, 128, 8
        $region40: #{tpu_custom_call.1} parent=31 // pred_fallthru
          _
      $region32: #{tpu_custom_call.1} parent=5 // pred_fallthru
        _
      %p362 = scmp.le.s32.totalorder 2, %s15
      // Predicated region
      $region41: #{tpu_custom_call.1} parent=5 // pred_check
        %p363 = pneg %p362
      $region42: #{tpu_custom_call.1} parent=5 // pred_check_branch
        %365 = sbr.rel (%p363) target = $region44
      $region43: #{tpu_custom_call.1} parent=5 // pred_region
        %s366 = ssub.s32 %s15, 2
        // Predicated region
        $region45: #{tpu_custom_call.1} parent=43 // pred_check
          %p367 = pneg %p112
        $region46: #{tpu_custom_call.1} parent=43 // pred_check_branch
          %369 = sbr.rel (%p367) target = $region48
        $region47: #{tpu_custom_call.1} parent=43 // pred_region
          %s370 = sand.u32 %s97, 1
          %s371 = scalar_lea.sflag [#allocation4], %s370
          %s372 = sand.u32 %s97, 1
          %s373 = smul.addr %s372, 72
          %s374 = scalar_lea.vmem [#allocation5], %s373
          %375 = dma.done %s371, 1152
        $region48: #{tpu_custom_call.1} parent=43 // pred_fallthru
          _
      $region44: #{tpu_custom_call.1} parent=5 // pred_fallthru
        _
    $region6: #{tpu_custom_call.1} parent=1 // loop_footer
      %s19 = sadd.s32 1, %s15
    $region7: #{tpu_custom_call.1} parent=1 // loop_footer_branch
      %14 = sbr.rel target = $region3
    $region8: #{tpu_custom_call.1} parent=1 // loop_exit
      _
    %376 = vsyncpa [#allocation3], 1
    %s377 = scalar_lea.sflag [#allocation3], 1
    %378 = vsyncpa %s377, 1
    %379 = vsyncpa [#allocation4], 1
    %s380 = scalar_lea.sflag [#allocation4], 1
    %381 = vsyncpa %s380, 1

</llo_original>
